<compile_context>
chip_gen: v6e
topology: v6e:2x2x1
jax: 0.10.0
libtpu: 0.0.40
codegen_flags: <defaults>
</compile_context>

<pallas_src>
from functools import lru_cache, partial

import numpy as np
import jax
import jax.numpy as jnp
from jax.experimental import pallas as pl
from jax.experimental.pallas import tpu as pltpu

WINDOW_SIZE = 11
SIGMA = 1.5
C1 = 0.01 ** 2
C2 = 0.03 ** 2


def _gaussian_window(window_size: int, sigma: float) -> np.ndarray:
    x = np.arange(window_size, dtype=np.float64) - window_size // 2
    g = np.exp(-(x ** 2) / (2.0 * sigma ** 2))
    return (g / g.sum()).astype(np.float32)


@lru_cache(maxsize=None)
def _conv_band_matrix(h: int,
                      window_size: int = WINDOW_SIZE,
                      sigma: float = SIGMA) -> np.ndarray:
    """A[u, r] = w[r - u + pad] so that (A @ X @ A.T) == 2D 'same' gaussian blur.

    The window is symmetric and the boundary truncation only depends on |r-u|,
    so A is exactly symmetric (A == A.T) -> the column pass can use A directly.
    """
    w = _gaussian_window(window_size, sigma)
    pad = window_size // 2
    a = np.zeros((h, h), dtype=np.float32)
    for u in range(h):
        for k in range(window_size):
            r = u + k - pad
            if 0 <= r < h:
                a[u, r] = w[k]
    return a


@lru_cache(maxsize=None)
def _conv_band_matrix_blockdiag(h: int, nblocks: int = 4,
                                window_size: int = WINDOW_SIZE,
                                sigma: float = SIGMA) -> np.ndarray:
    """blockdiag(A, A, A, A): row-pass blur of a (nblocks*h, h) stacked slab."""
    a = _conv_band_matrix(h, window_size, sigma)
    out = np.zeros((nblocks * h, nblocks * h), dtype=np.float32)
    for i in range(nblocks):
        out[i * h:(i + 1) * h, i * h:(i + 1) * h] = a
    return out


def _ssim_loss_kernel(res_ref, lab_ref, a_bd_ref, a_ref, o_ref):
    s = a_ref.shape[0]

    img1 = jax.nn.sigmoid(res_ref[...])
    img2 = jnp.clip(lab_ref[...], 0.0, 1.0)

    # Form the sigma-blur inputs immediately (img1/img2 die early) and stack
    # all four blur inputs along the sublane axis -> one (4S, S) slab.
    # blur() is linear, so blur(x*x) + blur(y*y) == blur(x*x + y*y).
    x_stack = jnp.concatenate(
        [img1, img2, img1 * img1 + img2 * img2, img1 * img2], axis=0)

    # Separable 'same' gaussian blur of everything in 2 MXU matmuls.
    # A symmetric -> second pass is the MXU-native NN form (no NT contraction).
    t = jnp.dot(a_bd_ref[...], x_stack, preferred_element_type=jnp.float32)
    blurred = jnp.dot(t, a_ref[...], preferred_element_type=jnp.float32)  # (4S, S)

    mu1 = blurred[0:s]
    mu2 = blurred[s:2 * s]
    mu1_mu2 = mu1 * mu2
    mu_sq_sum = mu1 * mu1 + mu2 * mu2
    sigma_sum = blurred[2 * s:3 * s] - mu_sq_sum      # sigma1^2 + sigma2^2
    sigma12 = blurred[3 * s:4 * s] - mu1_mu2

    num = (2.0 * mu1_mu2 + C1) * (2.0 * sigma12 + C2)
    den = (mu_sq_sum + C1) * (sigma_sum + C2)
    # EUP approximate reciprocal (rel. err ~2^-12) instead of a multi-op f32
    # divide; den >= C1*C2 > 0 so the relative error carries through unchanged.
    ssim_map = num * pl.reciprocal(den, approx=True)

    ssim_mean = jnp.sum(ssim_map, keepdims=True) * (1.0 / float(s * s))   # (1,1)
    o_ref[...] = 1.0 - ssim_mean


@partial(jax.jit, static_argnames=("wm_length",))
def ssim_loss(results: jax.Array, labels: jax.Array, *, wm_length: int) -> jax.Array:
    """Pallas implementation of SSIMLoss.forward (reduction='mean').

    Accepts results/labels of shape (..., wm_length) and returns a per-example
    loss of shape (...).  The original module's forward is the unbatched
    (wm_length,) -> scalar case; extra leading dims amortize the kernel launch.
    """
    s = int(np.sqrt(wm_length))
    if s * s != wm_length:
        raise ValueError(f"wm_length={wm_length} is not a perfect square")
    if results.shape != labels.shape or results.shape[-1] != wm_length:
        raise ValueError("results/labels must both have shape (..., wm_length)")

    batch_shape = results.shape[:-1]
    b = int(np.prod(batch_shape, dtype=np.int64)) if batch_shape else 1

    img = results.reshape(b, s, s).astype(jnp.float32)      # glue: reshape only
    tgt = labels.reshape(b, s, s).astype(jnp.float32)
    a = jnp.asarray(_conv_band_matrix(s))                    # (S, S)  jit constant
    a_bd = jnp.asarray(_conv_band_matrix_blockdiag(s))       # (4S, 4S) jit constant

    # TODO(synk): for S >= ~128 the dense band matmul wastes >90% of its MACs on
    # structural zeros (A is only ~11/S dense); switch blur() to an 11-tap
    # shift-and-MAC separable conv (or a stored-band (S,11) contraction) there.
    # VMEM is NOT the trigger -- the working set stays in the KB..low-MB range
    # well past S=512 even on v7x's 64 MiB.
    out = pl.pallas_call(
        _ssim_loss_kernel,
        out_shape=jax.ShapeDtypeStruct((b, 1, 1), jnp.float32),
        grid=(b,),
        in_specs=[
            pl.BlockSpec((None, s, s), lambda i: (i, 0, 0)),   # per-image logits
            pl.BlockSpec((None, s, s), lambda i: (i, 0, 0)),   # per-image target
            pl.BlockSpec((4 * s, 4 * s), lambda i: (0, 0)),    # A_bd (resident)
            pl.BlockSpec((s, s), lambda i: (0, 0)),            # A    (resident)
        ],
        out_specs=pl.BlockSpec((None, 1, 1), lambda i: (i, 0, 0)),
        compiler_params=pltpu.CompilerParams(
            dimension_semantics=("parallel",)),                # shards across v7x TCs
    )(img, tgt, a_bd, a)

    return out.reshape(batch_shape)


def _ssim_loss_ref(results, labels, wm_length):
    """Pure-JAX reference (single pair) for sanity checking."""
    s = int(np.sqrt(wm_length))
    img1 = jax.nn.sigmoid(results.reshape(s, s).astype(jnp.float32))
    img2 = jnp.clip(labels.reshape(s, s).astype(jnp.float32), 0.0, 1.0)
    a = jnp.asarray(_conv_band_matrix(s))

    def blur(x):
        return jnp.einsum("ur,rc,vc->uv", a, x, a,
                          precision=jax.lax.Precision.HIGHEST)

    mu1, mu2 = blur(img1), blur(img2)
    s1 = blur(img1 * img1) - mu1 * mu1
    s2 = blur(img2 * img2) - mu2 * mu2
    s12 = blur(img1 * img2) - mu1 * mu2
    ssim_map = ((2 * mu1 * mu2 + C1) * (2 * s12 + C2)) / (
        (mu1 * mu1 + mu2 * mu2 + C1) * (s1 + s2 + C2))
    return 1.0 - jnp.mean(ssim_map)


if __name__ == "__main__":
    wm_length = 256  # -> 16 x 16 watermark image
    key = jax.random.PRNGKey(0)
    k1, k2, k3, k4 = jax.random.split(key, 4)

    # --- single pair (exactly the module's forward) -------------------------
    results = jax.random.normal(k1, (wm_length,), dtype=jnp.float32)          # logits
    labels = jax.random.uniform(k2, (wm_length,), dtype=jnp.float32,
                                minval=-0.2, maxval=1.2)                      # needs clamp

    loss = jax.block_until_ready(ssim_loss(results, labels, wm_length=wm_length))
    ref = jax.block_until_ready(_ssim_loss_ref(results, labels, wm_length))
    assert np.isfinite(float(loss))
    # tolerance accounts for the ~2^-12 rel. error of the EUP approx reciprocal
    assert abs(float(loss) - float(ref)) < 2e-3, (float(loss), float(ref))

    # --- batched path (amortizes launch overhead; parallel axis -> 2 v7x TCs)
    B = 4
    res_b = jax.random.normal(k3, (B, wm_length), dtype=jnp.float32)
    lab_b = jax.random.uniform(k4, (B, wm_length), dtype=jnp.float32,
                               minval=-0.2, maxval=1.2)
    loss_b = jax.block_until_ready(ssim_loss(res_b, lab_b, wm_length=wm_length))
    assert loss_b.shape == (B,)
    ref_b = np.array([float(_ssim_loss_ref(res_b[i], lab_b[i], wm_length))
                      for i in range(B)])
    assert np.all(np.abs(np.asarray(loss_b) - ref_b) < 2e-3), (loss_b, ref_b)

    print("KERNEL_OK")
</pallas_src>

<mosaic_0001>
module attributes {stable_mosaic.version = 11 : i64} {
  func.func @_ssim_loss_kernel(%arg0: i32, %arg1: memref<1x16x16xf32, #tpu.memory_space<vmem>>, %arg2: memref<1x16x16xf32, #tpu.memory_space<vmem>>, %arg3: memref<64x64xf32, #tpu.memory_space<vmem>>, %arg4: memref<16x16xf32, #tpu.memory_space<vmem>>, %arg5: memref<1x1x1xf32, #tpu.memory_space<vmem>>) attributes {dimension_semantics = [#tpu.dimension_semantics<parallel>], iteration_bounds = array<i64: 1>, scalar_prefetch = 0 : i64, scratch_operands = 0 : i64, tpu.core_type = #tpu.core_type<tc>, window_params = [{transform_indices = @transform_0, window_bounds = array<i64: 1, 16, 16>}, {transform_indices = @transform_1, window_bounds = array<i64: 1, 16, 16>}, {pipeline_mode = #tpu.pipeline_mode<synchronous>, transform_indices = @transform_2, window_bounds = array<i64: 64, 64>}, {pipeline_mode = #tpu.pipeline_mode<synchronous>, transform_indices = @transform_3, window_bounds = array<i64: 16, 16>}, {transform_indices = @transform_4, window_bounds = array<i64: 1, 1, 1>}]} {
    %c0 = arith.constant 0 : index
    %c0_0 = arith.constant 0 : index
    %c0_1 = arith.constant 0 : index
    %0 = vector.load %arg1[%c0, %c0_0, %c0_1] : memref<1x16x16xf32, #tpu.memory_space<vmem>>, vector<1x16x16xf32>
    %1 = vector.shape_cast %0 : vector<1x16x16xf32> to vector<16x16xf32>
    %2 = arith.negf %1 : vector<16x16xf32>
    %3 = math.exp %2 : vector<16x16xf32>
    %cst = arith.constant 1.000000e+00 : f32
    %4 = vector.broadcast %cst : f32 to vector<16x16xf32>
    %5 = arith.addf %4, %3 : vector<16x16xf32>
    %6 = arith.divf %4, %5 : vector<16x16xf32>
    %c0_2 = arith.constant 0 : index
    %c0_3 = arith.constant 0 : index
    %c0_4 = arith.constant 0 : index
    %7 = vector.load %arg2[%c0_2, %c0_3, %c0_4] : memref<1x16x16xf32, #tpu.memory_space<vmem>>, vector<1x16x16xf32>
    %8 = vector.shape_cast %7 : vector<1x16x16xf32> to vector<16x16xf32>
    %cst_5 = arith.constant 0.000000e+00 : f32
    %cst_6 = arith.constant 1.000000e+00 : f32
    %9 = vector.broadcast %cst_5 : f32 to vector<16x16xf32>
    %10 = arith.maximumf %9, %8 : vector<16x16xf32>
    %11 = vector.broadcast %cst_6 : f32 to vector<16x16xf32>
    %12 = arith.minimumf %11, %10 : vector<16x16xf32>
    %13 = arith.mulf %6, %6 : vector<16x16xf32>
    %14 = arith.mulf %12, %12 : vector<16x16xf32>
    %15 = arith.addf %13, %14 : vector<16x16xf32>
    %16 = arith.mulf %6, %12 : vector<16x16xf32>
    %17 = tpu.concatenate %6, %12, %15, %16 in 0 : vector<16x16xf32>, vector<16x16xf32>, vector<16x16xf32>, vector<16x16xf32> -> vector<64x16xf32>
    %c0_7 = arith.constant 0 : index
    %c0_8 = arith.constant 0 : index
    %18 = vector.load %arg3[%c0_7, %c0_8] : memref<64x64xf32, #tpu.memory_space<vmem>>, vector<64x64xf32>
    %cst_9 = arith.constant dense<0.000000e+00> : vector<64x16xf32>
    %19 = tpu.matmul %18, %17, %cst_9 {dimension_numbers = #tpu.dot_dimension_numbers<[1], [0], [0], [1], [0, 0, 1, 1], [], []>} : vector<64x64xf32>, vector<64x16xf32>, vector<64x16xf32> -> vector<64x16xf32>
    %c0_10 = arith.constant 0 : index
    %c0_11 = arith.constant 0 : index
    %20 = vector.load %arg4[%c0_10, %c0_11] : memref<16x16xf32, #tpu.memory_space<vmem>>, vector<16x16xf32>
    %cst_12 = arith.constant dense<0.000000e+00> : vector<64x16xf32>
    %21 = tpu.matmul %19, %20, %cst_12 {dimension_numbers = #tpu.dot_dimension_numbers<[1], [0], [0], [1], [0, 0, 1, 1], [], []>} : vector<64x16xf32>, vector<16x16xf32>, vector<64x16xf32> -> vector<64x16xf32>
    %22 = vector.extract_strided_slice %21 {offsets = [0, 0], sizes = [16, 16], strides = [1, 1]} : vector<64x16xf32> to vector<16x16xf32>
    %23 = vector.extract_strided_slice %21 {offsets = [16, 0], sizes = [16, 16], strides = [1, 1]} : vector<64x16xf32> to vector<16x16xf32>
    %24 = arith.mulf %22, %23 : vector<16x16xf32>
    %25 = arith.mulf %22, %22 : vector<16x16xf32>
    %26 = arith.mulf %23, %23 : vector<16x16xf32>
    %27 = arith.addf %25, %26 : vector<16x16xf32>
    %28 = vector.extract_strided_slice %21 {offsets = [32, 0], sizes = [16, 16], strides = [1, 1]} : vector<64x16xf32> to vector<16x16xf32>
    %29 = arith.subf %28, %27 : vector<16x16xf32>
    %30 = vector.extract_strided_slice %21 {offsets = [48, 0], sizes = [16, 16], strides = [1, 1]} : vector<64x16xf32> to vector<16x16xf32>
    %31 = arith.subf %30, %24 : vector<16x16xf32>
    %cst_13 = arith.constant 2.000000e+00 : f32
    %32 = vector.broadcast %cst_13 : f32 to vector<16x16xf32>
    %33 = arith.mulf %32, %24 : vector<16x16xf32>
    %cst_14 = arith.constant 9.99999974E-5 : f32
    %34 = vector.broadcast %cst_14 : f32 to vector<16x16xf32>
    %35 = arith.addf %33, %34 : vector<16x16xf32>
    %cst_15 = arith.constant 2.000000e+00 : f32
    %36 = vector.broadcast %cst_15 : f32 to vector<16x16xf32>
    %37 = arith.mulf %36, %31 : vector<16x16xf32>
    %cst_16 = arith.constant 8.99999984E-4 : f32
    %38 = vector.broadcast %cst_16 : f32 to vector<16x16xf32>
    %39 = arith.addf %37, %38 : vector<16x16xf32>
    %40 = arith.mulf %35, %39 : vector<16x16xf32>
    %cst_17 = arith.constant 9.99999974E-5 : f32
    %41 = vector.broadcast %cst_17 : f32 to vector<16x16xf32>
    %42 = arith.addf %27, %41 : vector<16x16xf32>
    %cst_18 = arith.constant 8.99999984E-4 : f32
    %43 = vector.broadcast %cst_18 : f32 to vector<16x16xf32>
    %44 = arith.addf %29, %43 : vector<16x16xf32>
    %45 = arith.mulf %42, %44 : vector<16x16xf32>
    %46 = tpu.reciprocal %45 {approx = true} : vector<16x16xf32> -> vector<16x16xf32>
    %47 = arith.mulf %40, %46 : vector<16x16xf32>
    %48 = vector.shape_cast %47 : vector<16x16xf32> to vector<1x16x16xf32>
    %cst_19 = arith.constant dense<0.000000e+00> : vector<1xf32>
    %49 = vector.multi_reduction <add>, %48, %cst_19 [1, 2] : vector<1x16x16xf32> to vector<1xf32>
    %50 = vector.shape_cast %49 : vector<1xf32> to vector<1x1x1xf32>
    %51 = vector.extract %50[0, 0, 0] : f32 from vector<1x1x1xf32>
    %52 = vector.broadcast %51 : f32 to vector<1x1xf32>
    %cst_20 = arith.constant 3.906250e-03 : f32
    %53 = vector.broadcast %cst_20 : f32 to vector<1x1xf32>
    %54 = arith.mulf %52, %53 : vector<1x1xf32>
    %cst_21 = arith.constant 1.000000e+00 : f32
    %55 = vector.broadcast %cst_21 : f32 to vector<1x1xf32>
    %56 = arith.subf %55, %54 : vector<1x1xf32>
    %c0_22 = arith.constant 0 : index
    %c0_23 = arith.constant 0 : index
    %c0_24 = arith.constant 0 : index
    %57 = vector.load %arg5[%c0_22, %c0_23, %c0_24] : memref<1x1x1xf32, #tpu.memory_space<vmem>>, vector<1x1x1xf32>
    %58 = vector.shape_cast %57 : vector<1x1x1xf32> to vector<1x1xf32>
    %59 = vector.shape_cast %56 : vector<1x1xf32> to vector<1x1x1xf32>
    tpu.vector_store %arg5[%c0_22, %c0_23, %c0_24], %59 {strides = array<i32>} : memref<1x1x1xf32, #tpu.memory_space<vmem>>, vector<1x1x1xf32>,
    return
  }
  func.func @transform_0(%arg0: i32) -> (i32, i32, i32) {
    %c0_i32 = arith.constant 0 : i32
    %c0_i32_0 = arith.constant 0 : i32
    %c0_i32_1 = arith.constant 0 : i32
    return %arg0, %c0_i32, %c0_i32_0 : i32, i32, i32
  }
  func.func @transform_1(%arg0: i32) -> (i32, i32, i32) {
    %c0_i32 = arith.constant 0 : i32
    %c0_i32_0 = arith.constant 0 : i32
    %c0_i32_1 = arith.constant 0 : i32
    return %arg0, %c0_i32, %c0_i32_0 : i32, i32, i32
  }
  func.func @transform_2(%arg0: i32) -> (i32, i32) {
    %c0_i32 = arith.constant 0 : i32
    %c0_i32_0 = arith.constant 0 : i32
    %c0_i32_1 = arith.constant 0 : i32
    return %c0_i32, %c0_i32_0 : i32, i32
  }
  func.func @transform_3(%arg0: i32) -> (i32, i32) {
    %c0_i32 = arith.constant 0 : i32
    %c0_i32_0 = arith.constant 0 : i32
    %c0_i32_1 = arith.constant 0 : i32
    return %c0_i32, %c0_i32_0 : i32, i32
  }
  func.func @transform_4(%arg0: i32) -> (i32, i32, i32) {
    %c0_i32 = arith.constant 0 : i32
    %c0_i32_0 = arith.constant 0 : i32
    %c0_i32_1 = arith.constant 0 : i32
    return %arg0, %c0_i32, %c0_i32_0 : i32, i32, i32
  }
}

</mosaic_0001>

<llo_original>
// kernel: ssim_loss.1
$region0: #{ssim_loss.1}
  #allocation0 [shape = 'u32[]', space=smem, size = 0x4, offset = 0x4, fixed_abs, tag = 'smem constant byte address 0x4 - core index']
  #allocation1 [shape = 'u32[144,128]{1,0:T(1,128)}', space=vmem, size = 0x12000, scoped, tag = 'internal scratch']
  %s0 = inlined_call_operand.vmem [shape: f32[1,16,16], index: 0, kind: input, shape index: {}]
  %s1 = inlined_call_operand.vmem [shape: f32[1,16,16], index: 1, kind: input, shape index: {}]
  %s2 = inlined_call_operand.hbm [shape: f32[64,64], index: 2, kind: input, shape index: {}]
  %s3 = inlined_call_operand.vmem [shape: f32[16,16], index: 3, kind: input, shape index: {}]
  %s4 = inlined_call_operand.hbm [shape: f32[1,1,1], index: 4, kind: output, shape index: {}]
  %s5 = sld [smem:[#allocation0]]
  $region30: #{ssim_loss.1} parent=0
    _
  %s7 = ssub.s32 1, %s5
  %s8 = scalar_select 0, %s7, %s5
  $region1: #{ssim_loss.1} parent=0
    #allocation2 [shape = 'u8[32768]{0}', space=vmem, size = 0x8000, scoped, tag = 'input window, operand 2, single buffered']
    #allocation3 [shape = 's32[1]{0}', space=sflag, size = 0x4, scoped, tag = 'scoped memory for ssim_loss.1']
    #allocation4 [shape = 's32[1]{0}', space=sflag, size = 0x4, scoped, tag = 'scoped memory for ssim_loss.1']
    #allocation5 [shape = 'u8[512]{0}', space=vmem, size = 0x400, scoped, tag = 'output window, operand 0, single buffered']
    %9 = vsyncpa [#allocation3], 0
    %10 = vsyncpa [#allocation4], 0
    // Predicated region
    $region2: #{ssim_loss.1} parent=1 // pred_check
      _
    $region3: #{ssim_loss.1} parent=1 // pred_check_branch
      %12 = sbr.rel (0) target = $region5
    $region4: #{ssim_loss.1} parent=1 // pred_region
      _
    $region5: #{ssim_loss.1} parent=1 // pred_fallthru
      _
    // Predicated region
    $region6: #{ssim_loss.1} parent=1 // pred_check
      _
    $region7: #{ssim_loss.1} parent=1 // pred_check_branch
      %14 = sbr.rel (0) target = $region9
    $region8: #{ssim_loss.1} parent=1 // pred_region
      _
    $region9: #{ssim_loss.1} parent=1 // pred_fallthru
      _
    // Predicated region
    $region10: #{ssim_loss.1} parent=1 // pred_check
      _
    $region11: #{ssim_loss.1} parent=1 // pred_check_branch
      %16 = sbr.rel (0) target = $region13
    $region12: #{ssim_loss.1} parent=1 // pred_region
      %s18 = ssub.s32 1024, 1024
      %19 = vsyncadd [#allocation3], %s18
      %s20 = sshll.u32 [#allocation2], 4
      %s21 = int_to_ptr.vmem [resolvable:$true] %s20
      %26 = dma.hbm_to_vmem [thread:$0]  %s2, 1024, %s21, [#allocation3], 128, 128, 8
    $region13: #{ssim_loss.1} parent=1 // pred_fallthru
      _
    // Predicated region
    $region14: #{ssim_loss.1} parent=1 // pred_check
      _
    $region15: #{ssim_loss.1} parent=1 // pred_check_branch
      %28 = sbr.rel (0) target = $region17
    $region16: #{ssim_loss.1} parent=1 // pred_region
      _
    $region17: #{ssim_loss.1} parent=1 // pred_fallthru
      _
    // Predicated region
    $region18: #{ssim_loss.1} parent=1 // pred_check
      _
    $region19: #{ssim_loss.1} parent=1 // pred_check_branch
      %30 = sbr.rel (0) target = $region21
    $region20: #{ssim_loss.1} parent=1 // pred_region
      %31 = dma.done [#allocation3], 1024
    $region21: #{ssim_loss.1} parent=1 // pred_fallthru
      _
    %v32 = vld [vmem:[%s0] sm:$0xff]
    %v33 = vld [vmem:[%s0 + $0x8] sm:$0xff]
    %v34 = vxor.u32 %v32, 2147483648
    %v35 = vxor.u32 %v33, 2147483648
    %v36 = vmul.f32 %v34, 1.442695
    %v37 = vpow.pop %v36
    %v38 = vmul.f32 %v35, 1.442695
    %v39 = vpow.pop %v38
    %v40 = vadd.f32 %v37, 1.0
    %v41 = vadd.f32 %v39, 1.0
    %v42 = vrcp.pop %v40
    %v43 = vmul.f32 1.0, %v42
    %v44 = vrcp.pop %v41
    %v45 = vmul.f32 1.0, %v44
    %v46 = vld [vmem:[%s1] sm:$0xff]
    %v47 = vld [vmem:[%s1 + $0x8] sm:$0xff]
    %v48 = vmax.f32 %v46, 0.0
    %v49 = vmax.f32 %v47, 0.0
    %v50 = vmin.f32 %v48, 1.0
    %v51 = vmin.f32 %v49, 1.0
    %v52 = vmul.f32 %v43, %v43
    %v53 = vmul.f32 %v45, %v45
    %v54 = vmul.f32 %v50, %v50
    %v55 = vmul.f32 %v51, %v51
    %v56 = vadd.f32 %v52, %v54
    %v57 = vadd.f32 %v53, %v55
    %v58 = vmul.f32 %v43, %v50
    %v59 = vmul.f32 %v45, %v51
    %v60 = vld [vmem:[#allocation2] sm:$0xff]
    %v61 = vld [vmem:[#allocation2 + $0x8] sm:$0xff]
    %v62 = vld [vmem:[#allocation2 + $0x10] sm:$0xff]
    %v63 = vld [vmem:[#allocation2 + $0x18] sm:$0xff]
    %v64 = vld [vmem:[#allocation2 + $0x20] sm:$0xff]
    %v65 = vld [vmem:[#allocation2 + $0x28] sm:$0xff]
    %v66 = vld [vmem:[#allocation2 + $0x30] sm:$0xff]
    %v67 = vld [vmem:[#allocation2 + $0x38] sm:$0xff]
    %vm68 = vcmask 523264
    %v70 = vsel %vm68, %v60, 0
    %v73 = vsel %vm68, %v61, 0
    %v76 = vsel %vm68, %v62, 0
    %v79 = vsel %vm68, %v63, 0
    %v82 = vsel %vm68, %v64, 0
    %v85 = vsel %vm68, %v65, 0
    %v88 = vsel %vm68, %v66, 0
    %v91 = vsel %vm68, %v67, 0
    %93 = vmatprep.subr.mxu0 0.0
    %94 = vmatpush1.msra.mxu0 0.0
    %95 = vmatprep.subr.mxu0 0.0
    %96 = vmatpush1.msra.mxu0 0.0
    %97 = vmatprep.subr.mxu0 0.0
    %98 = vmatpush1.msra.mxu0 0.0
    %99 = vmatprep.subr.mxu0 0.0
    %100 = vmatpush1.msra.mxu0 0.0
    %101 = vmatprep.subr.mxu0 0.0
    %102 = vmatpush1.msra.mxu0 0.0
    %103 = vmatprep.subr.mxu0 0.0
    %104 = vmatpush1.msra.mxu0 0.0
    %105 = vmatprep.subr.mxu0 0.0
    %106 = vmatpush1.msra.mxu0 0.0
    %107 = vmatprep.subr.mxu0 0.0
    %108 = vmatpush1.msra.mxu0 0.0
    %109 = vmatprep.subr.mxu0 0.0
    %110 = vmatpush1.msra.mxu0 %v59
    %111 = vmatprep.subr.mxu0 0.0
    %112 = vmatpush1.msra.mxu0 %v58
    %113 = vmatprep.subr.mxu0 0.0
    %114 = vmatpush1.msra.mxu0 %v57
    %115 = vmatprep.subr.mxu0 0.0
    %116 = vmatpush1.msra.mxu0 %v56
    %117 = vmatprep.subr.mxu0 0.0
    %118 = vmatpush1.msra.mxu0 %v51
    %119 = vmatprep.subr.mxu0 0.0
    %120 = vmatpush1.msra.mxu0 %v50
    %121 = vmatprep.subr.mxu0 0.0
    %122 = vmatpush1.msra.mxu0 %v45
    %123 = vmatprep.subr.mxu0 0.0
    %124 = vmatpush1.msra.mxu0 %v43
    %125 = vmatprep.subr.mxu0 0.0
    %126 = vmatpush2.msra.mxu0 0.0
    %127 = vmatprep.subr.mxu0 0.0
    %128 = vmatpush2.msra.mxu0 0.0
    %129 = vmatprep.subr.mxu0 0.0
    %130 = vmatpush2.msra.mxu0 0.0
    %131 = vmatprep.subr.mxu0 0.0
    %132 = vmatpush2.msra.mxu0 0.0
    %133 = vmatprep.subr.mxu0 0.0
    %134 = vmatpush2.msra.mxu0 0.0
    %135 = vmatprep.subr.mxu0 0.0
    %136 = vmatpush2.msra.mxu0 0.0
    %137 = vmatprep.subr.mxu0 0.0
    %138 = vmatpush2.msra.mxu0 0.0
    %139 = vmatprep.subr.mxu0 0.0
    %140 = vmatpush2.msra.mxu0 0.0
    %141 = vmatprep.subr.mxu0 0.0
    %142 = vmatpush2.msra.mxu0 0.0
    %143 = vmatprep.subr.mxu0 0.0
    %144 = vmatpush2.msra.mxu0 0.0
    %145 = vmatprep.subr.mxu0 0.0
    %146 = vmatpush2.msra.mxu0 0.0
    %147 = vmatprep.subr.mxu0 0.0
    %148 = vmatpush2.msra.mxu0 0.0
    %149 = vmatprep.subr.mxu0 0.0
    %150 = vmatpush2.msra.mxu0 0.0
    %151 = vmatprep.subr.mxu0 0.0
    %152 = vmatpush2.msra.mxu0 0.0
    %153 = vmatprep.subr.mxu0 0.0
    %154 = vmatpush2.msra.mxu0 0.0
    %155 = vmatprep.subr.mxu0 0.0
    %156 = vmatpush2.msra.mxu0 0.0
    %157 = vmatprep.mubr.f32.mxu0 0.0
    %158 = vmatmul.mubr.f32.gmra.mxu0 %v70
    %v159 = vpop.f32.mrf.mxu0
    %v160 = vadd.f32 0.0, %v159
    %v161 = vpop.f32.mrf.mxu0
    %162 = vmatprep.mubr.f32.mxu0 0.0
    %163 = vmatmul.mubr.f32.gmra.mxu0 %v73
    %v164 = vpop.f32.mrf.mxu0
    %v165 = vadd.f32 0.0, %v164
    %v166 = vpop.f32.mrf.mxu0
    %167 = vmatprep.mubr.f32.mxu0 0.0
    %168 = vmatmul.mubr.f32.gmra.mxu0 %v76
    %v169 = vpop.f32.mrf.mxu0
    %v170 = vadd.f32 0.0, %v169
    %v171 = vpop.f32.mrf.mxu0
    %172 = vmatprep.mubr.f32.mxu0 0.0
    %173 = vmatmul.mubr.f32.gmra.mxu0 %v79
    %v174 = vpop.f32.mrf.mxu0
    %v175 = vadd.f32 0.0, %v174
    %v176 = vpop.f32.mrf.mxu0
    %177 = vmatprep.mubr.f32.mxu0 0.0
    %178 = vmatmul.mubr.f32.gmra.mxu0 %v82
    %v179 = vpop.f32.mrf.mxu0
    %v180 = vadd.f32 0.0, %v179
    %v181 = vpop.f32.mrf.mxu0
    %182 = vmatprep.mubr.f32.mxu0 0.0
    %183 = vmatmul.mubr.f32.gmra.mxu0 %v85
    %v184 = vpop.f32.mrf.mxu0
    %v185 = vadd.f32 0.0, %v184
    %v186 = vpop.f32.mrf.mxu0
    %187 = vmatprep.mubr.f32.mxu0 0.0
    %188 = vmatmul.mubr.f32.gmra.mxu0 %v88
    %v189 = vpop.f32.mrf.mxu0
    %v190 = vadd.f32 0.0, %v189
    %v191 = vpop.f32.mrf.mxu0
    %192 = vmatprep.mubr.f32.mxu0 0.0
    %193 = vmatmul.mubr.f32.gmra.mxu0 %v91
    %v194 = vpop.f32.mrf.mxu0
    %v195 = vadd.f32 0.0, %v194
    %v196 = vpop.f32.mrf.mxu0
    %197 = vdwg.mxu0
    %v198 = vld [vmem:[%s3] sm:$0xff]
    %v199 = vld [vmem:[%s3 + $0x8] sm:$0xff]
    %vm200 = vcmask 130048
    %v202 = vsel %vm200, %v160, 0
    %v205 = vsel %vm200, %v165, 0
    %v208 = vsel %vm200, %v170, 0
    %v211 = vsel %vm200, %v175, 0
    %v214 = vsel %vm200, %v180, 0
    %v217 = vsel %vm200, %v185, 0
    %v220 = vsel %vm200, %v190, 0
    %v223 = vsel %vm200, %v195, 0
    %225 = vmatprep.subr.mxu0 0.0
    %226 = vmatpush1.msra.mxu0 0.0
    %227 = vmatprep.subr.mxu0 0.0
    %228 = vmatpush1.msra.mxu0 0.0
    %229 = vmatprep.subr.mxu0 0.0
    %230 = vmatpush1.msra.mxu0 0.0
    %231 = vmatprep.subr.mxu0 0.0
    %232 = vmatpush1.msra.mxu0 0.0
    %233 = vmatprep.subr.mxu0 0.0
    %234 = vmatpush1.msra.mxu0 0.0
    %235 = vmatprep.subr.mxu0 0.0
    %236 = vmatpush1.msra.mxu0 0.0
    %237 = vmatprep.subr.mxu0 0.0
    %238 = vmatpush1.msra.mxu0 0.0
    %239 = vmatprep.subr.mxu0 0.0
    %240 = vmatpush1.msra.mxu0 0.0
    %241 = vmatprep.subr.mxu0 0.0
    %242 = vmatpush1.msra.mxu0 0.0
    %243 = vmatprep.subr.mxu0 0.0
    %244 = vmatpush1.msra.mxu0 0.0
    %245 = vmatprep.subr.mxu0 0.0
    %246 = vmatpush1.msra.mxu0 0.0
    %247 = vmatprep.subr.mxu0 0.0
    %248 = vmatpush1.msra.mxu0 0.0
    %249 = vmatprep.subr.mxu0 0.0
    %250 = vmatpush1.msra.mxu0 0.0
    %251 = vmatprep.subr.mxu0 0.0
    %252 = vmatpush1.msra.mxu0 0.0
    %253 = vmatprep.subr.mxu0 0.0
    %254 = vmatpush1.msra.mxu0 %v199
    %255 = vmatprep.subr.mxu0 0.0
    %256 = vmatpush1.msra.mxu0 %v198
    %257 = vmatprep.subr.mxu0 0.0
    %258 = vmatpush2.msra.mxu0 0.0
    %259 = vmatprep.subr.mxu0 0.0
    %260 = vmatpush2.msra.mxu0 0.0
    %261 = vmatprep.subr.mxu0 0.0
    %262 = vmatpush2.msra.mxu0 0.0
    %263 = vmatprep.subr.mxu0 0.0
    %264 = vmatpush2.msra.mxu0 0.0
    %265 = vmatprep.subr.mxu0 0.0
    %266 = vmatpush2.msra.mxu0 0.0
    %267 = vmatprep.subr.mxu0 0.0
    %268 = vmatpush2.msra.mxu0 0.0
    %269 = vmatprep.subr.mxu0 0.0
    %270 = vmatpush2.msra.mxu0 0.0
    %271 = vmatprep.subr.mxu0 0.0
    %272 = vmatpush2.msra.mxu0 0.0
    %273 = vmatprep.subr.mxu0 0.0
    %274 = vmatpush2.msra.mxu0 0.0
    %275 = vmatprep.subr.mxu0 0.0
    %276 = vmatpush2.msra.mxu0 0.0
    %277 = vmatprep.subr.mxu0 0.0
    %278 = vmatpush2.msra.mxu0 0.0
    %279 = vmatprep.subr.mxu0 0.0
    %280 = vmatpush2.msra.mxu0 0.0
    %281 = vmatprep.subr.mxu0 0.0
    %282 = vmatpush2.msra.mxu0 0.0
    %283 = vmatprep.subr.mxu0 0.0
    %284 = vmatpush2.msra.mxu0 0.0
    %285 = vmatprep.subr.mxu0 0.0
    %286 = vmatpush2.msra.mxu0 0.0
    %287 = vmatprep.subr.mxu0 0.0
    %288 = vmatpush2.msra.mxu0 0.0
    %289 = vmatprep.mubr.f32.mxu0 0.0
    %290 = vmatmul.mubr.f32.gmra.mxu0 %v202
    %v291 = vpop.f32.mrf.mxu0
    %v292 = vadd.f32 0.0, %v291
    %v293 = vpop.f32.mrf.mxu0
    %294 = vmatprep.mubr.f32.mxu0 0.0
    %295 = vmatmul.mubr.f32.gmra.mxu0 %v205
    %v296 = vpop.f32.mrf.mxu0
    %v297 = vadd.f32 0.0, %v296
    %v298 = vpop.f32.mrf.mxu0
    %299 = vmatprep.mubr.f32.mxu0 0.0
    %300 = vmatmul.mubr.f32.gmra.mxu0 %v208
    %v301 = vpop.f32.mrf.mxu0
    %v302 = vadd.f32 0.0, %v301
    %v303 = vpop.f32.mrf.mxu0
    %304 = vmatprep.mubr.f32.mxu0 0.0
    %305 = vmatmul.mubr.f32.gmra.mxu0 %v211
    %v306 = vpop.f32.mrf.mxu0
    %v307 = vadd.f32 0.0, %v306
    %v308 = vpop.f32.mrf.mxu0
    %309 = vmatprep.mubr.f32.mxu0 0.0
    %310 = vmatmul.mubr.f32.gmra.mxu0 %v214
    %v311 = vpop.f32.mrf.mxu0
    %v312 = vadd.f32 0.0, %v311
    %v313 = vpop.f32.mrf.mxu0
    %314 = vmatprep.mubr.f32.mxu0 0.0
    %315 = vmatmul.mubr.f32.gmra.mxu0 %v217
    %v316 = vpop.f32.mrf.mxu0
    %v317 = vadd.f32 0.0, %v316
    %v318 = vpop.f32.mrf.mxu0
    %319 = vmatprep.mubr.f32.mxu0 0.0
    %320 = vmatmul.mubr.f32.gmra.mxu0 %v220
    %v321 = vpop.f32.mrf.mxu0
    %v322 = vadd.f32 0.0, %v321
    %v323 = vpop.f32.mrf.mxu0
    %324 = vmatprep.mubr.f32.mxu0 0.0
    %325 = vmatmul.mubr.f32.gmra.mxu0 %v223
    %v326 = vpop.f32.mrf.mxu0
    %v327 = vadd.f32 0.0, %v326
    %v328 = vpop.f32.mrf.mxu0
    %329 = vdwg.mxu0
    %v330 = vmul.f32 %v292, %v302
    %v331 = vmul.f32 %v297, %v307
    %v332 = vmul.f32 %v292, %v292
    %v333 = vmul.f32 %v297, %v297
    %v334 = vmul.f32 %v302, %v302
    %v335 = vmul.f32 %v307, %v307
    %v336 = vadd.f32 %v332, %v334
    %v337 = vadd.f32 %v333, %v335
    %v338 = vsub.f32 %v312, %v336
    %v339 = vsub.f32 %v317, %v337
    %v340 = vsub.f32 %v322, %v330
    %v341 = vsub.f32 %v327, %v331
    %v342 = vmul.f32 %v330, 2.0
    %v343 = vmul.f32 %v331, 2.0
    %v344 = vadd.f32 %v342, 0.0001
    %v345 = vadd.f32 %v343, 0.0001
    %v346 = vmul.f32 %v340, 2.0
    %v347 = vmul.f32 %v341, 2.0
    %v348 = vadd.f32 %v346, 0.0009
    %v349 = vadd.f32 %v347, 0.0009
    %v350 = vmul.f32 %v344, %v348
    %v351 = vmul.f32 %v345, %v349
    %v352 = vadd.f32 %v336, 0.0001
    %v353 = vadd.f32 %v337, 0.0001
    %v354 = vadd.f32 %v338, 0.0009
    %v355 = vadd.f32 %v339, 0.0009
    %v356 = vmul.f32 %v352, %v354
    %v357 = vmul.f32 %v353, %v355
    %v358 = vrcp.pop %v356
    %v359 = vrcp.pop %v357
    %v360 = vmul.f32 %v350, %v358
    %v361 = vmul.f32 %v351, %v359
    %v362 = vsel %vm200, %v360, 0.0
    %v363 = vsel %vm200, %v361, 0.0
    %v364 = vadd.f32 %v362, %v363
    %365 = vadd.xlane.f32.xlu0 %v364
    %v366 = vpop.xlane.xlu0 %365
    %v367 = vrot.slane %v366, 4
    %v368 = vadd.f32 %v366, %v367
    %v369 = vrot.slane %v368, 2
    %v370 = vadd.f32 %v368, %v369
    %v371 = vrot.slane %v370, 1
    %v372 = vadd.f32 %v370, %v371
    %s373 = vtos %v372
    %v374 = vstv %s373
    %v375 = vmul.f32 %v374, 0.00390625
    %v376 = vsub.f32 1.0, %v375
    %vm377 = vcmask 0
    %378 = vst.msk [vmem:[#allocation5] sm:$0x1] %vm377, %v376
    // Predicated region
    $region22: #{ssim_loss.1} parent=1 // pred_check
      _
    $region23: #{ssim_loss.1} parent=1 // pred_check_branch
      %380 = sbr.rel (0) target = $region25
    $region24: #{ssim_loss.1} parent=1 // pred_region
      %s382 = ssub.s32 16, 16
      %383 = vsyncadd [#allocation4], %s382
      %s385 = sshll.u32 [#allocation5], 4
      %s386 = int_to_ptr.vmem [resolvable:$true] %s385
      %388 = dma.vmem_to_hbm [thread:$0]  %s386, 16, %s4, [#allocation4]
    $region25: #{ssim_loss.1} parent=1 // pred_fallthru
      _
    // Predicated region
    $region26: #{ssim_loss.1} parent=1 // pred_check
      _
    $region27: #{ssim_loss.1} parent=1 // pred_check_branch
      %390 = sbr.rel (0) target = $region29
    $region28: #{ssim_loss.1} parent=1 // pred_region
      %391 = dma.done [#allocation4], 16
    $region29: #{ssim_loss.1} parent=1 // pred_fallthru
      _
    %392 = vsyncpa [#allocation3], 1
    %393 = vsyncpa [#allocation4], 1

</llo_original>
